<compile_context>
chip_gen: v7x
topology: tpu7x:2x2x1
jax: 0.10.0
libtpu: 0.0.40
codegen_flags: <defaults>
</compile_context>

<pallas_src>
import functools

import jax
import jax.numpy as jnp
from jax.experimental import pallas as pl
from jax.experimental.pallas import tpu as pltpu

MASKING = -1000000000.0

ACTION_ENGINE_BACKWARD = 2
ACTION_ENGINE_FORWARD = 1
ACTION_STEER_LEFT = 3
ACTION_STEER_RIGHT = 4

STATE_ENGINE_BACKWARD_MAX = -10
STATE_ENGINE_FORWARD_MAX = -6
STATE_STEER_LEFT_MAX = -5
STATE_STEER_RIGHT_MAX = -1

_MAX_TB = 4096  # batch tile (rows per grid step); multiple of 8


def _bool_mask_kernel(x_ref, o_ref, *, priority: bool):
    # x_ref: (TB, LANE) trailing slab of the state; o_ref: (TB, OUT_N) float32.
    lane = x_ref.shape[1]
    out_n = o_ref.shape[1]

    xs = x_ref[...]                               # one vector load of the tile
    flags = xs == jnp.asarray(1.0, xs.dtype)      # (TB, LANE) bool, pure VPU

    def flag(neg_off):
        c = lane + neg_off                        # static column from the end
        return flags[:, c:c + 1]                  # (TB, 1) bool

    cond_back = flag(STATE_ENGINE_BACKWARD_MAX)
    cond_fwd = flag(STATE_ENGINE_FORWARD_MAX)
    cond_left = flag(STATE_STEER_LEFT_MAX)
    cond_right = flag(STATE_STEER_RIGHT_MAX)

    if priority:
        # elif chain of the 1-D branch: only the first matching rule fires.
        fires_back = cond_back
        fires_fwd = cond_fwd & ~cond_back
        fires_left = cond_left & ~cond_back & ~cond_fwd
        fires_right = cond_right & ~cond_back & ~cond_fwd & ~cond_left
    else:
        fires_back, fires_fwd, fires_left, fires_right = (
            cond_back, cond_fwd, cond_left, cond_right)

    col = jax.lax.broadcasted_iota(jnp.int32, (1, out_n), 1)
    hit = (((col == ACTION_ENGINE_BACKWARD) & fires_back)
           | ((col == ACTION_ENGINE_FORWARD) & fires_fwd)
           | ((col == ACTION_STEER_LEFT) & fires_left)
           | ((col == ACTION_STEER_RIGHT) & fires_right))

    o_ref[...] = jnp.where(hit, jnp.float32(MASKING), jnp.float32(1.0))


def boolean_mask_layer(x, output_size: int):
    """Pallas implementation of BooleanMaskLayer.forward (float32 output)."""
    x = jnp.squeeze(x)
    if x.ndim == 1:
        priority = True
        x2 = x[None, :]
    elif x.ndim == 2:
        priority = False
        x2 = x
    else:
        raise ValueError(f"unsupported rank after squeeze: {x.ndim}")

    b, s = x2.shape
    if s < 10:
        raise ValueError(f"feature dim must be >= 10 to hold flag columns, got {s}")

    # Only the last min(s, 128) columns are needed (all flag offsets are within
    # the last 10 columns) -> restrict the DMA to that lane slab.
    lane = min(s, 128)
    x_slab = x2[:, s - lane:] if lane < s else x2

    # Tile the batch dimension.
    if b <= _MAX_TB:
        tb = b            # block == full batch dim (satisfies (8,128) rule)
        grid_b = 1
    else:
        tb = _MAX_TB      # multiple of 8; Pallas masks the ragged last block
        grid_b = pl.cdiv(b, tb)

    out = pl.pallas_call(
        functools.partial(_bool_mask_kernel, priority=priority),
        out_shape=jax.ShapeDtypeStruct((b, output_size), jnp.float32),
        grid=(grid_b,),
        in_specs=[pl.BlockSpec((tb, lane), lambda i: (i, 0))],
        out_specs=pl.BlockSpec((tb, output_size), lambda i: (i, 0)),
        compiler_params=pltpu.CompilerParams(
            dimension_semantics=("parallel",)),
    )(x_slab)

    if priority:
        out = out[0]
    return out


def _numpy_reference(x, output_size):
    """Pure-numpy port of the PyTorch forward for a sanity check."""
    import numpy as np
    x = np.asarray(x).squeeze()
    masking = MASKING
    if x.ndim == 1:
        mask = np.ones(output_size)
        if x[STATE_ENGINE_BACKWARD_MAX] == 1.0:
            mask[ACTION_ENGINE_BACKWARD] = masking
        elif x[STATE_ENGINE_FORWARD_MAX] == 1.0:
            mask[ACTION_ENGINE_FORWARD] = masking
        elif x[STATE_STEER_LEFT_MAX] == 1.0:
            mask[ACTION_STEER_LEFT] = masking
        elif x[STATE_STEER_RIGHT_MAX] == 1.0:
            mask[ACTION_STEER_RIGHT] = masking
    else:
        mask = np.ones((x.shape[0], output_size))
        mask[np.where(x[:, STATE_ENGINE_BACKWARD_MAX] == 1.0), ACTION_ENGINE_BACKWARD] = masking
        mask[np.where(x[:, STATE_ENGINE_FORWARD_MAX] == 1.0), ACTION_ENGINE_FORWARD] = masking
        mask[np.where(x[:, STATE_STEER_LEFT_MAX] == 1.0), ACTION_STEER_LEFT] = masking
        mask[np.where(x[:, STATE_STEER_RIGHT_MAX] == 1.0), ACTION_STEER_RIGHT] = masking
    return mask


if __name__ == "__main__":
    import numpy as np

    output_size = 5          # actions 0..4
    key = jax.random.PRNGKey(0)

    # --- small batched (2-D) case: batch=2, state_dim=16 ---
    batch, state_dim = 2, 16
    x = jax.random.uniform(key, (batch, 1, state_dim), dtype=jnp.float32)
    # set some state flags to exactly 1.0 so masking rules trigger
    x = x.at[0, 0, state_dim + STATE_ENGINE_BACKWARD_MAX].set(1.0)
    x = x.at[0, 0, state_dim + STATE_STEER_LEFT_MAX].set(1.0)
    x = x.at[1, 0, state_dim + STATE_STEER_RIGHT_MAX].set(1.0)

    out2d = jax.block_until_ready(boolean_mask_layer(x, output_size))
    ref2d = _numpy_reference(np.asarray(x), output_size)
    np.testing.assert_allclose(np.asarray(out2d), ref2d, rtol=0, atol=0)

    # --- single-sample (1-D) case with elif priority semantics ---
    x1 = x[0]
    out1d = jax.block_until_ready(boolean_mask_layer(x1, output_size))
    ref1d = _numpy_reference(np.asarray(x1), output_size)
    np.testing.assert_allclose(np.asarray(out1d), ref1d, rtol=0, atol=0)

    # --- wider state (exercises the trailing-128-lane slab slice) ---
    batch2, state_dim2 = 64, 200
    k2 = jax.random.PRNGKey(1)
    xw = jax.random.uniform(k2, (batch2, state_dim2), dtype=jnp.float32)
    xw = xw.at[3, state_dim2 + STATE_ENGINE_FORWARD_MAX].set(1.0)
    xw = xw.at[7, state_dim2 + STATE_ENGINE_BACKWARD_MAX].set(1.0)
    xw = xw.at[7, state_dim2 + STATE_STEER_LEFT_MAX].set(1.0)
    xw = xw.at[42, state_dim2 + STATE_STEER_RIGHT_MAX].set(1.0)

    outw = jax.block_until_ready(boolean_mask_layer(xw, output_size))
    refw = _numpy_reference(np.asarray(xw), output_size)
    np.testing.assert_allclose(np.asarray(outw), refw, rtol=0, atol=0)

    print("KERNEL_OK")
</pallas_src>

<mosaic_0001>
module attributes {stable_mosaic.version = 11 : i64} {
  func.func @_bool_mask_kernel(%arg0: i32, %arg1: memref<2x16xf32, #tpu.memory_space<vmem>>, %arg2: memref<2x5xf32, #tpu.memory_space<vmem>>) attributes {dimension_semantics = [#tpu.dimension_semantics<parallel>], iteration_bounds = array<i64: 1>, scalar_prefetch = 0 : i64, scratch_operands = 0 : i64, tpu.core_type = #tpu.core_type<tc>, window_params = [{transform_indices = @transform_0, window_bounds = array<i64: 2, 16>}, {transform_indices = @transform_1, window_bounds = array<i64: 2, 5>}]} {
    %c0 = arith.constant 0 : index
    %c0_0 = arith.constant 0 : index
    %0 = vector.load %arg1[%c0, %c0_0] : memref<2x16xf32, #tpu.memory_space<vmem>>, vector<2x16xf32>
    %cst = arith.constant 1.000000e+00 : f32
    %1 = vector.broadcast %cst : f32 to vector<2x16xf32>
    %2 = arith.cmpf oeq, %0, %1 : vector<2x16xf32>
    %3 = vector.extract_strided_slice %2 {offsets = [0, 6], sizes = [2, 1], strides = [1, 1]} : vector<2x16xi1> to vector<2x1xi1>
    %4 = vector.extract_strided_slice %2 {offsets = [0, 10], sizes = [2, 1], strides = [1, 1]} : vector<2x16xi1> to vector<2x1xi1>
    %5 = vector.extract_strided_slice %2 {offsets = [0, 11], sizes = [2, 1], strides = [1, 1]} : vector<2x16xi1> to vector<2x1xi1>
    %6 = vector.extract_strided_slice %2 {offsets = [0, 15], sizes = [2, 1], strides = [1, 1]} : vector<2x16xi1> to vector<2x1xi1>
    %7 = tpu.iota {dimensions = array<i32: 1>} : vector<1x5xi32>
    %c2_i32 = arith.constant 2 : i32
    %8 = vector.broadcast %c2_i32 : i32 to vector<1x5xi32>
    %9 = arith.cmpi eq, %7, %8 : vector<1x5xi32>
    %10 = vector.broadcast %9 : vector<1x5xi1> to vector<2x5xi1>
    %11 = vector.broadcast %3 : vector<2x1xi1> to vector<2x5xi1>
    %12 = arith.andi %10, %11 : vector<2x5xi1>
    %c1_i32 = arith.constant 1 : i32
    %13 = vector.broadcast %c1_i32 : i32 to vector<1x5xi32>
    %14 = arith.cmpi eq, %7, %13 : vector<1x5xi32>
    %15 = vector.broadcast %14 : vector<1x5xi1> to vector<2x5xi1>
    %16 = vector.broadcast %4 : vector<2x1xi1> to vector<2x5xi1>
    %17 = arith.andi %15, %16 : vector<2x5xi1>
    %18 = arith.ori %12, %17 : vector<2x5xi1>
    %c3_i32 = arith.constant 3 : i32
    %19 = vector.broadcast %c3_i32 : i32 to vector<1x5xi32>
    %20 = arith.cmpi eq, %7, %19 : vector<1x5xi32>
    %21 = vector.broadcast %20 : vector<1x5xi1> to vector<2x5xi1>
    %22 = vector.broadcast %5 : vector<2x1xi1> to vector<2x5xi1>
    %23 = arith.andi %21, %22 : vector<2x5xi1>
    %24 = arith.ori %18, %23 : vector<2x5xi1>
    %c4_i32 = arith.constant 4 : i32
    %25 = vector.broadcast %c4_i32 : i32 to vector<1x5xi32>
    %26 = arith.cmpi eq, %7, %25 : vector<1x5xi32>
    %27 = vector.broadcast %26 : vector<1x5xi1> to vector<2x5xi1>
    %28 = vector.broadcast %6 : vector<2x1xi1> to vector<2x5xi1>
    %29 = arith.andi %27, %28 : vector<2x5xi1>
    %30 = arith.ori %24, %29 : vector<2x5xi1>
    %cst_1 = arith.constant -1.000000e+09 : f32
    %cst_2 = arith.constant 1.000000e+00 : f32
    %31 = vector.broadcast %cst_1 : f32 to vector<2x5xf32>
    %32 = vector.broadcast %cst_2 : f32 to vector<2x5xf32>
    %33 = arith.select %30, %31, %32 : vector<2x5xi1>, vector<2x5xf32>
    %c0_3 = arith.constant 0 : index
    %c0_4 = arith.constant 0 : index
    %34 = vector.load %arg2[%c0_3, %c0_4] : memref<2x5xf32, #tpu.memory_space<vmem>>, vector<2x5xf32>
    tpu.vector_store %arg2[%c0_3, %c0_4], %33 {strides = array<i32>} : memref<2x5xf32, #tpu.memory_space<vmem>>, vector<2x5xf32>,
    return
  }
  func.func @transform_0(%arg0: i32) -> (i32, i32) {
    %c0_i32 = arith.constant 0 : i32
    %c0_i32_0 = arith.constant 0 : i32
    return %arg0, %c0_i32 : i32, i32
  }
  func.func @transform_1(%arg0: i32) -> (i32, i32) {
    %c0_i32 = arith.constant 0 : i32
    %c0_i32_0 = arith.constant 0 : i32
    return %arg0, %c0_i32 : i32, i32
  }
}

</mosaic_0001>

<llo_original>
// kernel: tpu_custom_call.1
$region0: #{tpu_custom_call.1}
  #allocation0 [shape = 'u32[]', space=smem, size = 0x4, offset = 0x4, fixed_abs, tag = 'smem constant byte address 0x4 - core index']
  #allocation1 [shape = 'u32[144,128]{1,0:T(1,128)}', space=vmem, size = 0x12000, scoped, tag = 'internal scratch']
  %s0 = inlined_call_operand.hbm [shape: f32[2,16], index: 0, kind: input, shape index: {}]
  %s1 = inlined_call_operand.hbm [shape: f32[2,5], index: 1, kind: output, shape index: {}]
  %s2 = sld [smem:[#allocation0]]
  $region18: #{tpu_custom_call.1} parent=0
    _
  %s4 = ssub.s32 1, %s2
  %s5 = scalar_select 0, %s4, %s2
  $region1: #{tpu_custom_call.1} parent=0
    #allocation2 [shape = 'u8[1024]{0}', space=vmem, size = 0x400, scoped, tag = 'input window, operand 0, single buffered']
    #allocation3 [shape = 's32[1]{0}', space=sflag, size = 0x4, scoped, tag = 'scoped memory for tpu_custom_call.1']
    #allocation4 [shape = 's32[1]{0}', space=sflag, size = 0x4, scoped, tag = 'scoped memory for tpu_custom_call.1']
    #allocation5 [shape = 'u8[1024]{0}', space=vmem, size = 0x400, scoped, tag = 'output window, operand 0, single buffered']
    %6 = vsyncpa [#allocation3], 0
    %7 = vsyncpa [#allocation4], 0
    // Predicated region
    $region2: #{tpu_custom_call.1} parent=1 // pred_check
      _
    $region3: #{tpu_custom_call.1} parent=1 // pred_check_branch
      %9 = sbr.rel (0) target = $region5
    $region4: #{tpu_custom_call.1} parent=1 // pred_region
      %s11 = ssub.s32 32, 32
      %12 = vsyncadd [#allocation3], %s11
      %s14 = sshll.u32 [#allocation2], 4
      %s15 = int_to_ptr.vmem [resolvable:$true] %s14
      %17 = dma.hbm_to_vmem [thread:$0]  %s0, 32, %s15, [#allocation3]
    $region5: #{tpu_custom_call.1} parent=1 // pred_fallthru
      _
    // Predicated region
    $region6: #{tpu_custom_call.1} parent=1 // pred_check
      _
    $region7: #{tpu_custom_call.1} parent=1 // pred_check_branch
      %19 = sbr.rel (0) target = $region9
    $region8: #{tpu_custom_call.1} parent=1 // pred_region
      %20 = dma.done [#allocation3], 32
    $region9: #{tpu_custom_call.1} parent=1 // pred_fallthru
      _
    %v21 = vld [vmem:[#allocation2] sm:$0x3]
    %vm22 = vcmp.eq.f32.partialorder %v21, 1.0
    %v23 = vlaneseq
    %v24 = vand.u32 %v23, 127
    %vm25 = vcmp.eq.s32.totalorder %v24, 2
    %v26 = vsel %vm25, 1, 0
    %vm27 = vcmp.eq.s32.totalorder %v26, 1
    %v28 = vsel %vm22, 1, 0
    %29 = vset.pattern.permute.xlu0 6
    %30 = vperm.xlu0 %29, %v28
    %v31 = vpop.permute.xlu0 %30
    %vm32 = vcmp.eq.s32.totalorder %v31, 1
    %vm33 = vmand %vm27, %vm32
    %vm34 = vcmp.eq.s32.totalorder %v24, 1
    %v35 = vsel %vm34, 1, 0
    %vm36 = vcmp.eq.s32.totalorder %v35, 1
    %37 = vset.pattern.permute.xlu0 10
    %38 = vperm.xlu0 %37, %v28
    %v39 = vpop.permute.xlu0 %38
    %vm40 = vcmp.eq.s32.totalorder %v39, 1
    %vm41 = vmand %vm36, %vm40
    %vm42 = vmor %vm33, %vm41
    %vm43 = vcmp.eq.s32.totalorder %v24, 3
    %v44 = vsel %vm43, 1, 0
    %vm45 = vcmp.eq.s32.totalorder %v44, 1
    %46 = vset.pattern.permute.xlu0 11
    %47 = vperm.xlu0 %46, %v28
    %v48 = vpop.permute.xlu0 %47
    %vm49 = vcmp.eq.s32.totalorder %v48, 1
    %vm50 = vmand %vm45, %vm49
    %vm51 = vmor %vm42, %vm50
    %vm52 = vcmp.eq.s32.totalorder %v24, 4
    %v53 = vsel %vm52, 1, 0
    %vm54 = vcmp.eq.s32.totalorder %v53, 1
    %55 = vset.pattern.permute.xlu0 15
    %56 = vperm.xlu0 %55, %v28
    %v57 = vpop.permute.xlu0 %56
    %vm58 = vcmp.eq.s32.totalorder %v57, 1
    %vm59 = vmand %vm54, %vm58
    %vm60 = vmor %vm51, %vm59
    %v61 = vsel %vm60, -1e+09, 1.0
    %vm62 = vcmask 33792
    %63 = vst.msk [vmem:[#allocation5] sm:$0x3] %vm62, %v61
    // Predicated region
    $region10: #{tpu_custom_call.1} parent=1 // pred_check
      _
    $region11: #{tpu_custom_call.1} parent=1 // pred_check_branch
      %65 = sbr.rel (0) target = $region13
    $region12: #{tpu_custom_call.1} parent=1 // pred_region
      %s67 = ssub.s32 32, 32
      %68 = vsyncadd [#allocation4], %s67
      %s70 = sshll.u32 [#allocation5], 4
      %s71 = int_to_ptr.vmem [resolvable:$true] %s70
      %73 = dma.vmem_to_hbm [thread:$0]  %s71, 32, %s1, [#allocation4]
    $region13: #{tpu_custom_call.1} parent=1 // pred_fallthru
      _
    // Predicated region
    $region14: #{tpu_custom_call.1} parent=1 // pred_check
      _
    $region15: #{tpu_custom_call.1} parent=1 // pred_check_branch
      %75 = sbr.rel (0) target = $region17
    $region16: #{tpu_custom_call.1} parent=1 // pred_region
      %76 = dma.done [#allocation4], 32
    $region17: #{tpu_custom_call.1} parent=1 // pred_fallthru
      _
    %77 = vsyncpa [#allocation3], 1
    %78 = vsyncpa [#allocation4], 1

</llo_original>
